<compile_context>
chip_gen: v7x
topology: tpu7x:2x2x1
jax: 0.10.0
libtpu: 0.0.40
codegen_flags: <defaults>
</compile_context>

<pallas_src>
import jax
import jax.numpy as jnp
from jax.experimental import pallas as pl
from jax.experimental.pallas import tpu as pltpu

LANE = 128
SUBLANE = 8


def _round_up(x, m):
    return (x + m - 1) // m * m


def _choose_batch_tile(B, S, H, itemsize=2, vmem_budget_bytes=8 << 20):
    """Largest multiple-of-8 batch tile whose double-buffered bf16 embedding block
    stays within a conservative per-tensor VMEM budget (safe on v7x's 64 MiB)."""
    rows = vmem_budget_bytes // (2 * S * H * itemsize)   # 2x for double buffering
    rows = max(SUBLANE, (rows // SUBLANE) * SUBLANE)
    return int(min(_round_up(B, SUBLANE), rows))


# ----------------------------------------------------------------------------
# Fused kernel: mask gen -> masked mean pool -> tanh pooler dense -> classifier
# ----------------------------------------------------------------------------
def _bert_head_kernel(vl_ref, emb_ref, wp_ref, bp_ref, wc_ref, bc_ref, out_ref):
    TB, S, H = emb_ref.shape

    # attention mask computed in-kernel from valid_length (fused; pure VPU filler)
    col = jax.lax.broadcasted_iota(jnp.int32, (TB, S), 1)     # (TB, S) column index
    vl = vl_ref[...]                                          # (TB, 1) int32
    mask = (col < vl).astype(emb_ref.dtype)                   # (TB, S) bf16 {0,1}

    emb = emb_ref[...]                                        # (TB, S, H) bf16

    # masked sum over S as an MXU contraction, f32 accumulation
    summed = jnp.einsum(
        "bqs,bsh->bqh", mask[:, None, :], emb,
        preferred_element_type=jnp.float32,
    )[:, 0, :]                                                # (TB, H) f32

    # mean over valid tokens; divisor == min(valid_len, S) (mask row-sum), guarded >= 1
    count = jnp.minimum(vl, S).astype(jnp.float32)            # (TB, 1)
    pooled = summed * pl.reciprocal(jnp.maximum(count, 1.0), approx=True)

    # TODO(synk): stand-in for the external `bert` encoder's pooler output.
    # BERT-style pooler: tanh(x @ Wp + bp) -- bf16 matmul, f32 epilogue
    hp = jnp.dot(pooled.astype(wp_ref.dtype), wp_ref[...],
                 preferred_element_type=jnp.float32) + bp_ref[...]
    pooler = jnp.tanh(hp)                                     # (TB, H) f32

    # classifier = nn.Linear(hidden_size, num_classes), lane-padded N
    logits = jnp.dot(pooler.astype(wc_ref.dtype), wc_ref[...],
                     preferred_element_type=jnp.float32) + bc_ref[...]
    out_ref[...] = logits                                     # (TB, Cp) f32


def bert_head(valid_length_2d, embeddings, wp, bp, wc, bc, *, batch_tile):
    B_pad, S, H = embeddings.shape
    Cp = wc.shape[1]
    TB = batch_tile
    assert B_pad % TB == 0
    nb = B_pad // TB

    return pl.pallas_call(
        _bert_head_kernel,
        out_shape=jax.ShapeDtypeStruct((B_pad, Cp), jnp.float32),
        grid=(nb,),
        in_specs=[
            pl.BlockSpec((TB, 1), lambda i: (i, 0)),          # valid_length
            pl.BlockSpec((TB, S, H), lambda i: (i, 0, 0)),    # embeddings (bf16)
            pl.BlockSpec((H, H), lambda i: (0, 0)),           # pooler weight (bf16)
            pl.BlockSpec((1, H), lambda i: (0, 0)),           # pooler bias (f32)
            pl.BlockSpec((H, Cp), lambda i: (0, 0)),          # classifier weight (bf16)
            pl.BlockSpec((1, Cp), lambda i: (0, 0)),          # classifier bias (f32)
        ],
        out_specs=pl.BlockSpec((TB, Cp), lambda i: (i, 0)),
        compiler_params=pltpu.CompilerParams(
            dimension_semantics=("parallel",),
            vmem_limit_bytes=32 * 1024 * 1024,
        ),
    )(valid_length_2d, embeddings, wp, bp, wc, bc)


# ----------------------------------------------------------------------------
# Full BERTClassifier.forward equivalent
# ----------------------------------------------------------------------------
def bert_classifier_forward(params, token_ids, valid_length, segment_ids, num_classes):
    B, S = token_ids.shape
    H = params["tok_table"].shape[1]

    TB = _choose_batch_tile(B, S, H)
    B_pad = _round_up(B, TB)
    pad = B_pad - B

    # pad batch; padded rows get valid_length=0 (fully masked) and are sliced off below
    tok = jnp.pad(token_ids.astype(jnp.int32), ((0, pad), (0, 0)))
    seg = jnp.pad(segment_ids.astype(jnp.int32), ((0, pad), (0, 0)))
    vl = jnp.pad(valid_length.astype(jnp.int32), ((0, pad),)).reshape(B_pad, 1)

    # embedding lookups stay in XLA glue, emitted directly in bf16 (halves HBM traffic)
    # TODO(synk): fuse the table gather into the kernel via scalar-prefetch/pl.Element.
    embeddings = (jnp.take(params["tok_table"], tok, axis=0)
                  + jnp.take(params["seg_table"], seg, axis=0)).astype(jnp.bfloat16)

    logits_pad = bert_head(vl, embeddings,
                           params["wp"], params["bp"], params["wc"], params["bc"],
                           batch_tile=TB)

    # dr_rate is None -> dropout skipped; slice off batch padding + lane padding
    return logits_pad[:B, :num_classes]


def init_params(key, vocab=100, n_seg=2, hidden=32, num_classes=7):
    ks = jax.random.split(key, 4)
    scale = 0.02
    cp = _round_up(num_classes, LANE)
    wc = scale * jax.random.normal(ks[3], (hidden, num_classes), jnp.float32)
    wc_pad = jnp.zeros((hidden, cp), jnp.float32).at[:, :num_classes].set(wc)
    return {
        "tok_table": (scale * jax.random.normal(ks[0], (vocab, hidden), jnp.float32)
                      ).astype(jnp.bfloat16),
        "seg_table": (scale * jax.random.normal(ks[1], (n_seg, hidden), jnp.float32)
                      ).astype(jnp.bfloat16),
        "wp": (scale * jax.random.normal(ks[2], (hidden, hidden), jnp.float32)
               ).astype(jnp.bfloat16),
        "bp": jnp.zeros((1, hidden), jnp.float32),
        "wc": wc_pad.astype(jnp.bfloat16),          # zero-padded to 128 lanes
        "bc": jnp.zeros((1, cp), jnp.float32),      # zero-padded to 128 lanes
    }


if __name__ == "__main__":
    key = jax.random.PRNGKey(0)
    B, S, H, C, V = 2, 8, 32, 7, 100

    k1, k2, k3 = jax.random.split(key, 3)
    token_ids = jax.random.randint(k1, (B, S), 0, V, dtype=jnp.int32)
    segment_ids = jnp.zeros((B, S), dtype=jnp.int32)
    valid_length = jnp.array([5, 8], dtype=jnp.int32)

    params = init_params(k3, vocab=V, n_seg=2, hidden=H, num_classes=C)

    logits = bert_classifier_forward(params, token_ids, valid_length, segment_ids,
                                     num_classes=C)
    logits = jax.block_until_ready(logits)
    assert logits.shape == (B, C) and logits.dtype == jnp.float32
    assert bool(jnp.all(jnp.isfinite(logits)))
    print("KERNEL_OK")
</pallas_src>

<mosaic_0001>
module attributes {stable_mosaic.version = 11 : i64} {
  func.func @_bert_head_kernel(%arg0: i32, %arg1: memref<8x1xi32, #tpu.memory_space<vmem>>, %arg2: memref<8x8x32xbf16, #tpu.memory_space<vmem>>, %arg3: memref<32x32xbf16, #tpu.memory_space<vmem>>, %arg4: memref<1x32xf32, #tpu.memory_space<vmem>>, %arg5: memref<32x128xbf16, #tpu.memory_space<vmem>>, %arg6: memref<1x128xf32, #tpu.memory_space<vmem>>, %arg7: memref<8x128xf32, #tpu.memory_space<vmem>>) attributes {dimension_semantics = [#tpu.dimension_semantics<parallel>], iteration_bounds = array<i64: 1>, scalar_prefetch = 0 : i64, scratch_operands = 0 : i64, tpu.core_type = #tpu.core_type<tc>, window_params = [{transform_indices = @transform_0, window_bounds = array<i64: 8, 1>}, {transform_indices = @transform_1, window_bounds = array<i64: 8, 8, 32>}, {pipeline_mode = #tpu.pipeline_mode<synchronous>, transform_indices = @transform_2, window_bounds = array<i64: 32, 32>}, {pipeline_mode = #tpu.pipeline_mode<synchronous>, transform_indices = @transform_3, window_bounds = array<i64: 1, 32>}, {pipeline_mode = #tpu.pipeline_mode<synchronous>, transform_indices = @transform_4, window_bounds = array<i64: 32, 128>}, {pipeline_mode = #tpu.pipeline_mode<synchronous>, transform_indices = @transform_5, window_bounds = array<i64: 1, 128>}, {transform_indices = @transform_6, window_bounds = array<i64: 8, 128>}]} {
    %0 = tpu.iota {dimensions = array<i32: 1>} : vector<8x8xi32>
    %c0 = arith.constant 0 : index
    %c0_0 = arith.constant 0 : index
    %1 = vector.load %arg1[%c0, %c0_0] : memref<8x1xi32, #tpu.memory_space<vmem>>, vector<8x1xi32>
    %2 = vector.broadcast %1 : vector<8x1xi32> to vector<8x8xi32>
    %3 = arith.cmpi slt, %0, %2 : vector<8x8xi32>
    %4 = arith.extui %3 : vector<8x8xi1> to vector<8x8xi32>
    %5 = arith.sitofp %4 : vector<8x8xi32> to vector<8x8xf32>
    %6 = arith.truncf %5 : vector<8x8xf32> to vector<8x8xbf16>
    %c0_1 = arith.constant 0 : index
    %c0_2 = arith.constant 0 : index
    %c0_3 = arith.constant 0 : index
    %7 = vector.load %arg2[%c0_1, %c0_2, %c0_3] : memref<8x8x32xbf16, #tpu.memory_space<vmem>>, vector<8x8x32xbf16>
    %8 = vector.shape_cast %6 : vector<8x8xbf16> to vector<8x1x8xbf16>
    "tpu.trace_start"() <{level = 10 : i32, message = "bqs,bsh->bqh"}> : () -> ()
    %cst = arith.constant dense<0.000000e+00> : vector<8x1x32xf32>
    %9 = tpu.matmul %8, %7, %cst {dimension_numbers = #tpu.dot_dimension_numbers<[2], [1], [1], [2], [0, 0, 0, 1, 1, 2], [0], [0]>} : vector<8x1x8xbf16>, vector<8x8x32xbf16>, vector<8x1x32xf32> -> vector<8x1x32xf32>
    "tpu.trace_stop"() : () -> ()
    %10 = vector.shape_cast %9 : vector<8x1x32xf32> to vector<8x32xf32>
    %c8_i32 = arith.constant 8 : i32
    %11 = vector.broadcast %c8_i32 : i32 to vector<8x1xi32>
    %12 = arith.minsi %1, %11 : vector<8x1xi32>
    %13 = arith.sitofp %12 : vector<8x1xi32> to vector<8x1xf32>
    %cst_4 = arith.constant 1.000000e+00 : f32
    %14 = vector.broadcast %cst_4 : f32 to vector<8x1xf32>
    %15 = arith.maximumf %13, %14 : vector<8x1xf32>
    %16 = tpu.reciprocal %15 {approx = true} : vector<8x1xf32> -> vector<8x1xf32>
    %17 = vector.broadcast %16 : vector<8x1xf32> to vector<8x32xf32>
    %18 = arith.mulf %10, %17 : vector<8x32xf32>
    %19 = arith.truncf %18 : vector<8x32xf32> to vector<8x32xbf16>
    %c0_5 = arith.constant 0 : index
    %c0_6 = arith.constant 0 : index
    %20 = vector.load %arg3[%c0_5, %c0_6] : memref<32x32xbf16, #tpu.memory_space<vmem>>, vector<32x32xbf16>
    %cst_7 = arith.constant dense<0.000000e+00> : vector<8x32xf32>
    %21 = tpu.matmul %19, %20, %cst_7 {dimension_numbers = #tpu.dot_dimension_numbers<[1], [0], [0], [1], [0, 0, 1, 1], [], []>} : vector<8x32xbf16>, vector<32x32xbf16>, vector<8x32xf32> -> vector<8x32xf32>
    %c0_8 = arith.constant 0 : index
    %c0_9 = arith.constant 0 : index
    %22 = vector.load %arg4[%c0_8, %c0_9] : memref<1x32xf32, #tpu.memory_space<vmem>>, vector<1x32xf32>
    %23 = vector.broadcast %22 : vector<1x32xf32> to vector<8x32xf32>
    %24 = arith.addf %21, %23 : vector<8x32xf32>
    %25 = math.tanh %24 : vector<8x32xf32>
    %26 = arith.truncf %25 : vector<8x32xf32> to vector<8x32xbf16>
    %c0_10 = arith.constant 0 : index
    %c0_11 = arith.constant 0 : index
    %27 = vector.load %arg5[%c0_10, %c0_11] : memref<32x128xbf16, #tpu.memory_space<vmem>>, vector<32x128xbf16>
    %cst_12 = arith.constant dense<0.000000e+00> : vector<8x128xf32>
    %28 = tpu.matmul %26, %27, %cst_12 {dimension_numbers = #tpu.dot_dimension_numbers<[1], [0], [0], [1], [0, 0, 1, 1], [], []>} : vector<8x32xbf16>, vector<32x128xbf16>, vector<8x128xf32> -> vector<8x128xf32>
    %c0_13 = arith.constant 0 : index
    %c0_14 = arith.constant 0 : index
    %29 = vector.load %arg6[%c0_13, %c0_14] : memref<1x128xf32, #tpu.memory_space<vmem>>, vector<1x128xf32>
    %30 = vector.broadcast %29 : vector<1x128xf32> to vector<8x128xf32>
    %31 = arith.addf %28, %30 : vector<8x128xf32>
    %c0_15 = arith.constant 0 : index
    %c0_16 = arith.constant 0 : index
    %32 = vector.load %arg7[%c0_15, %c0_16] : memref<8x128xf32, #tpu.memory_space<vmem>>, vector<8x128xf32>
    tpu.vector_store %arg7[%c0_15, %c0_16], %31 {strides = array<i32>} : memref<8x128xf32, #tpu.memory_space<vmem>>, vector<8x128xf32>,
    return
  }
  func.func @transform_0(%arg0: i32) -> (i32, i32) {
    %c0_i32 = arith.constant 0 : i32
    %c0_i32_0 = arith.constant 0 : i32
    return %arg0, %c0_i32 : i32, i32
  }
  func.func @transform_1(%arg0: i32) -> (i32, i32, i32) {
    %c0_i32 = arith.constant 0 : i32
    %c0_i32_0 = arith.constant 0 : i32
    %c0_i32_1 = arith.constant 0 : i32
    return %arg0, %c0_i32, %c0_i32_0 : i32, i32, i32
  }
  func.func @transform_2(%arg0: i32) -> (i32, i32) {
    %c0_i32 = arith.constant 0 : i32
    %c0_i32_0 = arith.constant 0 : i32
    %c0_i32_1 = arith.constant 0 : i32
    return %c0_i32, %c0_i32_0 : i32, i32
  }
  func.func @transform_3(%arg0: i32) -> (i32, i32) {
    %c0_i32 = arith.constant 0 : i32
    %c0_i32_0 = arith.constant 0 : i32
    %c0_i32_1 = arith.constant 0 : i32
    return %c0_i32, %c0_i32_0 : i32, i32
  }
  func.func @transform_4(%arg0: i32) -> (i32, i32) {
    %c0_i32 = arith.constant 0 : i32
    %c0_i32_0 = arith.constant 0 : i32
    %c0_i32_1 = arith.constant 0 : i32
    return %c0_i32, %c0_i32_0 : i32, i32
  }
  func.func @transform_5(%arg0: i32) -> (i32, i32) {
    %c0_i32 = arith.constant 0 : i32
    %c0_i32_0 = arith.constant 0 : i32
    %c0_i32_1 = arith.constant 0 : i32
    return %c0_i32, %c0_i32_0 : i32, i32
  }
  func.func @transform_6(%arg0: i32) -> (i32, i32) {
    %c0_i32 = arith.constant 0 : i32
    %c0_i32_0 = arith.constant 0 : i32
    return %arg0, %c0_i32 : i32, i32
  }
}

</mosaic_0001>

<llo_original>
// kernel: tpu_custom_call.1
$region0: #{tpu_custom_call.1}
  #allocation0 [shape = 'u32[]', space=smem, size = 0x4, offset = 0x4, fixed_abs, tag = 'smem constant byte address 0x4 - core index']
  #allocation1 [shape = 'u32[144,128]{1,0:T(1,128)}', space=vmem, size = 0x12000, scoped, tag = 'internal scratch']
  %s0 = inlined_call_operand.vmem [shape: s32[8,1], index: 0, kind: input, shape index: {}]
  %s1 = inlined_call_operand.hbm [shape: bf16[8,8,32], index: 1, kind: input, shape index: {}]
  %s2 = inlined_call_operand.vmem [shape: bf16[32,32], index: 2, kind: input, shape index: {}]
  %s3 = inlined_call_operand.vmem [shape: f32[1,32], index: 3, kind: input, shape index: {}]
  %s4 = inlined_call_operand.hbm [shape: bf16[32,128], index: 4, kind: input, shape index: {}]
  %s5 = inlined_call_operand.vmem [shape: f32[1,128], index: 5, kind: input, shape index: {}]
  %s6 = inlined_call_operand.hbm [shape: f32[8,128], index: 6, kind: output, shape index: {}]
  %s7 = sld [smem:[#allocation0]]
  $region42: #{tpu_custom_call.1} parent=0
    _
  %s9 = ssub.s32 1, %s7
  %s10 = scalar_select 0, %s9, %s7
  $region1: #{tpu_custom_call.1} parent=0
    #allocation2 [shape = 'u8[16384]{0}', space=vmem, size = 0x4000, scoped, tag = 'input window, operand 1, single buffered']
    #allocation3 [shape = 's32[1]{0}', space=sflag, size = 0x4, scoped, tag = 'scoped memory for tpu_custom_call.1']
    #allocation4 [shape = 's32[1]{0}', space=sflag, size = 0x4, scoped, tag = 'scoped memory for tpu_custom_call.1']
    #allocation5 [shape = 'u8[8192]{0}', space=vmem, size = 0x2000, scoped, tag = 'input window, operand 4, single buffered']
    #allocation6 [shape = 's32[1]{0}', space=sflag, size = 0x4, scoped, tag = 'scoped memory for tpu_custom_call.1']
    #allocation7 [shape = 'u8[4096]{0}', space=vmem, size = 0x1000, scoped, tag = 'output window, operand 0, single buffered']
    %11 = vsyncpa [#allocation3], 0
    %12 = vsyncpa [#allocation6], 0
    %13 = vsyncpa [#allocation4], 0
    // Predicated region
    $region2: #{tpu_custom_call.1} parent=1 // pred_check
      _
    $region3: #{tpu_custom_call.1} parent=1 // pred_check_branch
      %15 = sbr.rel (0) target = $region5
    $region4: #{tpu_custom_call.1} parent=1 // pred_region
      _
    $region5: #{tpu_custom_call.1} parent=1 // pred_fallthru
      _
    // Predicated region
    $region6: #{tpu_custom_call.1} parent=1 // pred_check
      _
    $region7: #{tpu_custom_call.1} parent=1 // pred_check_branch
      %17 = sbr.rel (0) target = $region9
    $region8: #{tpu_custom_call.1} parent=1 // pred_region
      %s19 = ssub.s32 512, 512
      %20 = vsyncadd [#allocation3], %s19
      %s21 = sshll.u32 [#allocation2], 4
      %s22 = int_to_ptr.vmem [resolvable:$true] %s21
      %27 = dma.hbm_to_vmem [thread:$0]  %s1, 512, %s22, [#allocation3], 64, 64, 4
    $region9: #{tpu_custom_call.1} parent=1 // pred_fallthru
      _
    // Predicated region
    $region10: #{tpu_custom_call.1} parent=1 // pred_check
      _
    $region11: #{tpu_custom_call.1} parent=1 // pred_check_branch
      %29 = sbr.rel (0) target = $region13
    $region12: #{tpu_custom_call.1} parent=1 // pred_region
      _
    $region13: #{tpu_custom_call.1} parent=1 // pred_fallthru
      _
    // Predicated region
    $region14: #{tpu_custom_call.1} parent=1 // pred_check
      _
    $region15: #{tpu_custom_call.1} parent=1 // pred_check_branch
      %31 = sbr.rel (0) target = $region17
    $region16: #{tpu_custom_call.1} parent=1 // pred_region
      _
    $region17: #{tpu_custom_call.1} parent=1 // pred_fallthru
      _
    // Predicated region
    $region18: #{tpu_custom_call.1} parent=1 // pred_check
      _
    $region19: #{tpu_custom_call.1} parent=1 // pred_check_branch
      %33 = sbr.rel (0) target = $region21
    $region20: #{tpu_custom_call.1} parent=1 // pred_region
      %s35 = ssub.s32 256, 256
      %36 = vsyncadd [#allocation6], %s35
      %s37 = sshll.u32 [#allocation5], 4
      %s38 = int_to_ptr.vmem [resolvable:$true] %s37
      %43 = dma.hbm_to_vmem [thread:$0]  %s4, 256, %s38, [#allocation6], 64, 64, 4
    $region21: #{tpu_custom_call.1} parent=1 // pred_fallthru
      _
    // Predicated region
    $region22: #{tpu_custom_call.1} parent=1 // pred_check
      _
    $region23: #{tpu_custom_call.1} parent=1 // pred_check_branch
      %45 = sbr.rel (0) target = $region25
    $region24: #{tpu_custom_call.1} parent=1 // pred_region
      _
    $region25: #{tpu_custom_call.1} parent=1 // pred_fallthru
      _
    // Predicated region
    $region26: #{tpu_custom_call.1} parent=1 // pred_check
      _
    $region27: #{tpu_custom_call.1} parent=1 // pred_check_branch
      %47 = sbr.rel (0) target = $region29
    $region28: #{tpu_custom_call.1} parent=1 // pred_region
      %48 = dma.done [#allocation3], 512
    $region29: #{tpu_custom_call.1} parent=1 // pred_fallthru
      _
    // Predicated region
    $region30: #{tpu_custom_call.1} parent=1 // pred_check
      _
    $region31: #{tpu_custom_call.1} parent=1 // pred_check_branch
      %50 = sbr.rel (0) target = $region33
    $region32: #{tpu_custom_call.1} parent=1 // pred_region
      %51 = dma.done [#allocation6], 256
    $region33: #{tpu_custom_call.1} parent=1 // pred_fallthru
      _
    %v53 = vlaneseq
    %v54 = vand.u32 %v53, 127
    %v55 = vld [vmem:[%s0] sm:$0xff]
    %56 = vset.pattern.permute.xlu0 0
    %57 = vperm.xlu0 %56, %v55
    %v58 = vpop.permute.xlu0 %57
    %vm59 = vcmp.lt.s32.totalorder %v54, %v58
    %v60 = vsel %vm59, 1, 0
    %v61 = vcvt.s32.f32 %v60
    %v62 = vpack.c.bf16 %v61, %v61
    %v63 = vld [vmem:[#allocation2] sm:$0xf]
    %v64 = vld [vmem:[#allocation2 + $0x4] sm:$0xf]
    %v65 = vld [vmem:[#allocation2 + $0x8] sm:$0xf]
    %v66 = vld [vmem:[#allocation2 + $0xc] sm:$0xf]
    %v67 = vld [vmem:[#allocation2 + $0x10] sm:$0xf]
    %v68 = vld [vmem:[#allocation2 + $0x14] sm:$0xf]
    %v69 = vld [vmem:[#allocation2 + $0x18] sm:$0xf]
    %v70 = vld [vmem:[#allocation2 + $0x1c] sm:$0xf]
    %v73 = vunpack.c.l.s4 1966171168
    %v74 = vunpack.c.0.s8 %v73
    %v75 = vlaneseq
    %v76 = vshrl.u32 %v75, 7
    %v77 = vsub.s32 %v74, %v76
    %v78 = vrot.slane %v62, %v77
    %v79 = vcombine.high %v78, %v78
    %v81 = vunpack.c.l.s4 1966171168
    %v82 = vunpack.c.0.s8 %v81
    %v83 = vlaneseq
    %v84 = vshrl.u32 %v83, 7
    %v85 = vsub.s32 %v82, %v84
    %v86 = vrot.slane %v78, %v85
    %v88 = vunpack.c.l.s4 1966171168
    %v89 = vunpack.c.0.s8 %v88
    %v90 = vlaneseq
    %v91 = vshrl.u32 %v90, 7
    %v92 = vsub.s32 %v89, %v91
    %v93 = vrot.slane %v79, %v92
    %v94 = vcombine.high %v86, %v86
    %v95 = vcombine.high %v93, %v93
    %v96 = vunpack.i.l.s16 %v86
    %v97 = vunpack.i.h.s16 %v86
    %v98 = vunpack.i.l.s16 %v93
    %v99 = vunpack.i.h.s16 %v93
    %v100 = vunpack.i.l.s16 %v94
    %v101 = vunpack.i.h.s16 %v94
    %v102 = vunpack.i.l.s16 %v95
    %v103 = vunpack.i.h.s16 %v95
    %v104 = vpack.i.b16 %v96, %v96
    %v105 = vlaneseq
    %v106 = vshrl.u32 %v105, 7
    %v107 = vsub.s32 0, %v106
    %v108 = vrot.slane %v104, %v107
    %vm109 = vcmask 64512
    %v111 = vsel %vm109, %v108, 0
    %vm113 = vcmask 1043456
    %v115 = vsel %vm113, %v63, 0
    %117 = vmatprep.subr.bf16.mxu0 0
    %118 = vmatpush1.bf16.msra.mxu0 %v115
    %119 = vmatprep.subr.bf16.mxu0 0
    %120 = vmatpush1.bf16.msra.mxu0 0
    %121 = vmatprep.subr.bf16.mxu0 0
    %122 = vmatpush1.bf16.msra.mxu0 0
    %123 = vmatprep.subr.bf16.mxu0 0
    %124 = vmatpush1.bf16.msra.mxu0 0
    %125 = vmatprep.subr.bf16.mxu0 0
    %126 = vmatpush1.bf16.msra.mxu0 0
    %127 = vmatprep.subr.bf16.mxu0 0
    %128 = vmatpush1.bf16.msra.mxu0 0
    %129 = vmatprep.subr.bf16.mxu0 0
    %130 = vmatpush1.bf16.msra.mxu0 0
    %131 = vmatprep.subr.bf16.mxu0 0
    %132 = vmatpush1.bf16.msra.mxu0 0
    %133 = vmatprep.subr.bf16.mxu0 0
    %134 = vmatpush1.bf16.msra.mxu0 0
    %135 = vmatprep.subr.bf16.mxu0 0
    %136 = vmatpush1.bf16.msra.mxu0 0
    %137 = vmatprep.subr.bf16.mxu0 0
    %138 = vmatpush1.bf16.msra.mxu0 0
    %139 = vmatprep.subr.bf16.mxu0 0
    %140 = vmatpush1.bf16.msra.mxu0 0
    %141 = vmatprep.subr.bf16.mxu0 0
    %142 = vmatpush1.bf16.msra.mxu0 0
    %143 = vmatprep.subr.bf16.mxu0 0
    %144 = vmatpush1.bf16.msra.mxu0 0
    %145 = vmatprep.subr.bf16.mxu0 0
    %146 = vmatpush1.bf16.msra.mxu0 0
    %147 = vmatprep.subr.bf16.mxu0 0
    %148 = vmatpush1.bf16.msra.mxu0 0
    %149 = vmatprep.mubr.bf16.mxu0 0
    %150 = vmatmul.mubr.bf16.gmra.mrb[0].mxu0 %v111
    %v151 = vpop.f32.mrb[0].mxu0
    %v152 = vadd.f32 0.0, %v151
    %v153 = vpop.f32.mrb[0].mxu0
    %v154 = vpop.f32.mrb[0].mxu0
    %v155 = vpop.f32.mrb[0].mxu0
    %156 = vdwg.mxu0
    %v157 = vpack.i.b16 %v97, %v97
    %v158 = vlaneseq
    %v159 = vshrl.u32 %v158, 7
    %v160 = vsub.s32 0, %v159
    %v161 = vrot.slane %v157, %v160
    %v163 = vsel %vm109, %v161, 0
    %v166 = vsel %vm113, %v64, 0
    %168 = vmatprep.subr.bf16.mxu0 0
    %169 = vmatpush1.bf16.msra.mxu0 %v166
    %170 = vmatprep.subr.bf16.mxu0 0
    %171 = vmatpush1.bf16.msra.mxu0 0
    %172 = vmatprep.subr.bf16.mxu0 0
    %173 = vmatpush1.bf16.msra.mxu0 0
    %174 = vmatprep.subr.bf16.mxu0 0
    %175 = vmatpush1.bf16.msra.mxu0 0
    %176 = vmatprep.subr.bf16.mxu0 0
    %177 = vmatpush1.bf16.msra.mxu0 0
    %178 = vmatprep.subr.bf16.mxu0 0
    %179 = vmatpush1.bf16.msra.mxu0 0
    %180 = vmatprep.subr.bf16.mxu0 0
    %181 = vmatpush1.bf16.msra.mxu0 0
    %182 = vmatprep.subr.bf16.mxu0 0
    %183 = vmatpush1.bf16.msra.mxu0 0
    %184 = vmatprep.subr.bf16.mxu0 0
    %185 = vmatpush1.bf16.msra.mxu0 0
    %186 = vmatprep.subr.bf16.mxu0 0
    %187 = vmatpush1.bf16.msra.mxu0 0
    %188 = vmatprep.subr.bf16.mxu0 0
    %189 = vmatpush1.bf16.msra.mxu0 0
    %190 = vmatprep.subr.bf16.mxu0 0
    %191 = vmatpush1.bf16.msra.mxu0 0
    %192 = vmatprep.subr.bf16.mxu0 0
    %193 = vmatpush1.bf16.msra.mxu0 0
    %194 = vmatprep.subr.bf16.mxu0 0
    %195 = vmatpush1.bf16.msra.mxu0 0
    %196 = vmatprep.subr.bf16.mxu0 0
    %197 = vmatpush1.bf16.msra.mxu0 0
    %198 = vmatprep.subr.bf16.mxu0 0
    %199 = vmatpush1.bf16.msra.mxu0 0
    %200 = vmatprep.mubr.bf16.mxu0 0
    %201 = vmatmul.mubr.bf16.gmra.mrb[0].mxu0 %v163
    %v202 = vpop.f32.mrb[0].mxu0
    %v203 = vadd.f32 0.0, %v202
    %v204 = vpop.f32.mrb[0].mxu0
    %v205 = vpop.f32.mrb[0].mxu0
    %v206 = vpop.f32.mrb[0].mxu0
    %207 = vdwg.mxu0
    %v208 = vpack.i.b16 %v98, %v98
    %v209 = vlaneseq
    %v210 = vshrl.u32 %v209, 7
    %v211 = vsub.s32 0, %v210
    %v212 = vrot.slane %v208, %v211
    %v214 = vsel %vm109, %v212, 0
    %v217 = vsel %vm113, %v65, 0
    %219 = vmatprep.subr.bf16.mxu0 0
    %220 = vmatpush1.bf16.msra.mxu0 %v217
    %221 = vmatprep.subr.bf16.mxu0 0
    %222 = vmatpush1.bf16.msra.mxu0 0
    %223 = vmatprep.subr.bf16.mxu0 0
    %224 = vmatpush1.bf16.msra.mxu0 0
    %225 = vmatprep.subr.bf16.mxu0 0
    %226 = vmatpush1.bf16.msra.mxu0 0
    %227 = vmatprep.subr.bf16.mxu0 0
    %228 = vmatpush1.bf16.msra.mxu0 0
    %229 = vmatprep.subr.bf16.mxu0 0
    %230 = vmatpush1.bf16.msra.mxu0 0
    %231 = vmatprep.subr.bf16.mxu0 0
    %232 = vmatpush1.bf16.msra.mxu0 0
    %233 = vmatprep.subr.bf16.mxu0 0
    %234 = vmatpush1.bf16.msra.mxu0 0
    %235 = vmatprep.subr.bf16.mxu0 0
    %236 = vmatpush1.bf16.msra.mxu0 0
    %237 = vmatprep.subr.bf16.mxu0 0
    %238 = vmatpush1.bf16.msra.mxu0 0
    %239 = vmatprep.subr.bf16.mxu0 0
    %240 = vmatpush1.bf16.msra.mxu0 0
    %241 = vmatprep.subr.bf16.mxu0 0
    %242 = vmatpush1.bf16.msra.mxu0 0
    %243 = vmatprep.subr.bf16.mxu0 0
    %244 = vmatpush1.bf16.msra.mxu0 0
    %245 = vmatprep.subr.bf16.mxu0 0
    %246 = vmatpush1.bf16.msra.mxu0 0
    %247 = vmatprep.subr.bf16.mxu0 0
    %248 = vmatpush1.bf16.msra.mxu0 0
    %249 = vmatprep.subr.bf16.mxu0 0
    %250 = vmatpush1.bf16.msra.mxu0 0
    %251 = vmatprep.mubr.bf16.mxu0 0
    %252 = vmatmul.mubr.bf16.gmra.mrb[0].mxu0 %v214
    %v253 = vpop.f32.mrb[0].mxu0
    %v254 = vadd.f32 0.0, %v253
    %v255 = vpop.f32.mrb[0].mxu0
    %v256 = vpop.f32.mrb[0].mxu0
    %v257 = vpop.f32.mrb[0].mxu0
    %258 = vdwg.mxu0
    %v259 = vpack.i.b16 %v99, %v99
    %v260 = vlaneseq
    %v261 = vshrl.u32 %v260, 7
    %v262 = vsub.s32 0, %v261
    %v263 = vrot.slane %v259, %v262
    %v265 = vsel %vm109, %v263, 0
    %v268 = vsel %vm113, %v66, 0
    %270 = vmatprep.subr.bf16.mxu0 0
    %271 = vmatpush1.bf16.msra.mxu0 %v268
    %272 = vmatprep.subr.bf16.mxu0 0
    %273 = vmatpush1.bf16.msra.mxu0 0
    %274 = vmatprep.subr.bf16.mxu0 0
    %275 = vmatpush1.bf16.msra.mxu0 0
    %276 = vmatprep.subr.bf16.mxu0 0
    %277 = vmatpush1.bf16.msra.mxu0 0
    %278 = vmatprep.subr.bf16.mxu0 0
    %279 = vmatpush1.bf16.msra.mxu0 0
    %280 = vmatprep.subr.bf16.mxu0 0
    %281 = vmatpush1.bf16.msra.mxu0 0
    %282 = vmatprep.subr.bf16.mxu0 0
    %283 = vmatpush1.bf16.msra.mxu0 0
    %284 = vmatprep.subr.bf16.mxu0 0
    %285 = vmatpush1.bf16.msra.mxu0 0
    %286 = vmatprep.subr.bf16.mxu0 0
    %287 = vmatpush1.bf16.msra.mxu0 0
    %288 = vmatprep.subr.bf16.mxu0 0
    %289 = vmatpush1.bf16.msra.mxu0 0
    %290 = vmatprep.subr.bf16.mxu0 0
    %291 = vmatpush1.bf16.msra.mxu0 0
    %292 = vmatprep.subr.bf16.mxu0 0
    %293 = vmatpush1.bf16.msra.mxu0 0
    %294 = vmatprep.subr.bf16.mxu0 0
    %295 = vmatpush1.bf16.msra.mxu0 0
    %296 = vmatprep.subr.bf16.mxu0 0
    %297 = vmatpush1.bf16.msra.mxu0 0
    %298 = vmatprep.subr.bf16.mxu0 0
    %299 = vmatpush1.bf16.msra.mxu0 0
    %300 = vmatprep.subr.bf16.mxu0 0
    %301 = vmatpush1.bf16.msra.mxu0 0
    %302 = vmatprep.mubr.bf16.mxu0 0
    %303 = vmatmul.mubr.bf16.gmra.mrb[0].mxu0 %v265
    %v304 = vpop.f32.mrb[0].mxu0
    %v305 = vadd.f32 0.0, %v304
    %v306 = vpop.f32.mrb[0].mxu0
    %v307 = vpop.f32.mrb[0].mxu0
    %v308 = vpop.f32.mrb[0].mxu0
    %309 = vdwg.mxu0
    %v310 = vpack.i.b16 %v100, %v100
    %v311 = vlaneseq
    %v312 = vshrl.u32 %v311, 7
    %v313 = vsub.s32 0, %v312
    %v314 = vrot.slane %v310, %v313
    %v316 = vsel %vm109, %v314, 0
    %v319 = vsel %vm113, %v67, 0
    %321 = vmatprep.subr.bf16.mxu0 0
    %322 = vmatpush1.bf16.msra.mxu0 %v319
    %323 = vmatprep.subr.bf16.mxu0 0
    %324 = vmatpush1.bf16.msra.mxu0 0
    %325 = vmatprep.subr.bf16.mxu0 0
    %326 = vmatpush1.bf16.msra.mxu0 0
    %327 = vmatprep.subr.bf16.mxu0 0
    %328 = vmatpush1.bf16.msra.mxu0 0
    %329 = vmatprep.subr.bf16.mxu0 0
    %330 = vmatpush1.bf16.msra.mxu0 0
    %331 = vmatprep.subr.bf16.mxu0 0
    %332 = vmatpush1.bf16.msra.mxu0 0
    %333 = vmatprep.subr.bf16.mxu0 0
    %334 = vmatpush1.bf16.msra.mxu0 0
    %335 = vmatprep.subr.bf16.mxu0 0
    %336 = vmatpush1.bf16.msra.mxu0 0
    %337 = vmatprep.subr.bf16.mxu0 0
    %338 = vmatpush1.bf16.msra.mxu0 0
    %339 = vmatprep.subr.bf16.mxu0 0
    %340 = vmatpush1.bf16.msra.mxu0 0
    %341 = vmatprep.subr.bf16.mxu0 0
    %342 = vmatpush1.bf16.msra.mxu0 0
    %343 = vmatprep.subr.bf16.mxu0 0
    %344 = vmatpush1.bf16.msra.mxu0 0
    %345 = vmatprep.subr.bf16.mxu0 0
    %346 = vmatpush1.bf16.msra.mxu0 0
    %347 = vmatprep.subr.bf16.mxu0 0
    %348 = vmatpush1.bf16.msra.mxu0 0
    %349 = vmatprep.subr.bf16.mxu0 0
    %350 = vmatpush1.bf16.msra.mxu0 0
    %351 = vmatprep.subr.bf16.mxu0 0
    %352 = vmatpush1.bf16.msra.mxu0 0
    %353 = vmatprep.mubr.bf16.mxu0 0
    %354 = vmatmul.mubr.bf16.gmra.mrb[0].mxu0 %v316
    %v355 = vpop.f32.mrb[0].mxu0
    %v356 = vadd.f32 0.0, %v355
    %v357 = vpop.f32.mrb[0].mxu0
    %v358 = vpop.f32.mrb[0].mxu0
    %v359 = vpop.f32.mrb[0].mxu0
    %360 = vdwg.mxu0
    %v361 = vpack.i.b16 %v101, %v101
    %v362 = vlaneseq
    %v363 = vshrl.u32 %v362, 7
    %v364 = vsub.s32 0, %v363
    %v365 = vrot.slane %v361, %v364
    %v367 = vsel %vm109, %v365, 0
    %v370 = vsel %vm113, %v68, 0
    %372 = vmatprep.subr.bf16.mxu0 0
    %373 = vmatpush1.bf16.msra.mxu0 %v370
    %374 = vmatprep.subr.bf16.mxu0 0
    %375 = vmatpush1.bf16.msra.mxu0 0
    %376 = vmatprep.subr.bf16.mxu0 0
    %377 = vmatpush1.bf16.msra.mxu0 0
    %378 = vmatprep.subr.bf16.mxu0 0
    %379 = vmatpush1.bf16.msra.mxu0 0
    %380 = vmatprep.subr.bf16.mxu0 0
    %381 = vmatpush1.bf16.msra.mxu0 0
    %382 = vmatprep.subr.bf16.mxu0 0
    %383 = vmatpush1.bf16.msra.mxu0 0
    %384 = vmatprep.subr.bf16.mxu0 0
    %385 = vmatpush1.bf16.msra.mxu0 0
    %386 = vmatprep.subr.bf16.mxu0 0
    %387 = vmatpush1.bf16.msra.mxu0 0
    %388 = vmatprep.subr.bf16.mxu0 0
    %389 = vmatpush1.bf16.msra.mxu0 0
    %390 = vmatprep.subr.bf16.mxu0 0
    %391 = vmatpush1.bf16.msra.mxu0 0
    %392 = vmatprep.subr.bf16.mxu0 0
    %393 = vmatpush1.bf16.msra.mxu0 0
    %394 = vmatprep.subr.bf16.mxu0 0
    %395 = vmatpush1.bf16.msra.mxu0 0
    %396 = vmatprep.subr.bf16.mxu0 0
    %397 = vmatpush1.bf16.msra.mxu0 0
    %398 = vmatprep.subr.bf16.mxu0 0
    %399 = vmatpush1.bf16.msra.mxu0 0
    %400 = vmatprep.subr.bf16.mxu0 0
    %401 = vmatpush1.bf16.msra.mxu0 0
    %402 = vmatprep.subr.bf16.mxu0 0
    %403 = vmatpush1.bf16.msra.mxu0 0
    %404 = vmatprep.mubr.bf16.mxu0 0
    %405 = vmatmul.mubr.bf16.gmra.mrb[0].mxu0 %v367
    %v406 = vpop.f32.mrb[0].mxu0
    %v407 = vadd.f32 0.0, %v406
    %v408 = vpop.f32.mrb[0].mxu0
    %v409 = vpop.f32.mrb[0].mxu0
    %v410 = vpop.f32.mrb[0].mxu0
    %411 = vdwg.mxu0
    %v412 = vpack.i.b16 %v102, %v102
    %v413 = vlaneseq
    %v414 = vshrl.u32 %v413, 7
    %v415 = vsub.s32 0, %v414
    %v416 = vrot.slane %v412, %v415
    %v418 = vsel %vm109, %v416, 0
    %v421 = vsel %vm113, %v69, 0
    %423 = vmatprep.subr.bf16.mxu0 0
    %424 = vmatpush1.bf16.msra.mxu0 %v421
    %425 = vmatprep.subr.bf16.mxu0 0
    %426 = vmatpush1.bf16.msra.mxu0 0
    %427 = vmatprep.subr.bf16.mxu0 0
    %428 = vmatpush1.bf16.msra.mxu0 0
    %429 = vmatprep.subr.bf16.mxu0 0
    %430 = vmatpush1.bf16.msra.mxu0 0
    %431 = vmatprep.subr.bf16.mxu0 0
    %432 = vmatpush1.bf16.msra.mxu0 0
    %433 = vmatprep.subr.bf16.mxu0 0
    %434 = vmatpush1.bf16.msra.mxu0 0
    %435 = vmatprep.subr.bf16.mxu0 0
    %436 = vmatpush1.bf16.msra.mxu0 0
    %437 = vmatprep.subr.bf16.mxu0 0
    %438 = vmatpush1.bf16.msra.mxu0 0
    %439 = vmatprep.subr.bf16.mxu0 0
    %440 = vmatpush1.bf16.msra.mxu0 0
    %441 = vmatprep.subr.bf16.mxu0 0
    %442 = vmatpush1.bf16.msra.mxu0 0
    %443 = vmatprep.subr.bf16.mxu0 0
    %444 = vmatpush1.bf16.msra.mxu0 0
    %445 = vmatprep.subr.bf16.mxu0 0
    %446 = vmatpush1.bf16.msra.mxu0 0
    %447 = vmatprep.subr.bf16.mxu0 0
    %448 = vmatpush1.bf16.msra.mxu0 0
    %449 = vmatprep.subr.bf16.mxu0 0
    %450 = vmatpush1.bf16.msra.mxu0 0
    %451 = vmatprep.subr.bf16.mxu0 0
    %452 = vmatpush1.bf16.msra.mxu0 0
    %453 = vmatprep.subr.bf16.mxu0 0
    %454 = vmatpush1.bf16.msra.mxu0 0
    %455 = vmatprep.mubr.bf16.mxu0 0
    %456 = vmatmul.mubr.bf16.gmra.mrb[0].mxu0 %v418
    %v457 = vpop.f32.mrb[0].mxu0
    %v458 = vadd.f32 0.0, %v457
    %v459 = vpop.f32.mrb[0].mxu0
    %v460 = vpop.f32.mrb[0].mxu0
    %v461 = vpop.f32.mrb[0].mxu0
    %462 = vdwg.mxu0
    %v463 = vpack.i.b16 %v103, %v103
    %v464 = vlaneseq
    %v465 = vshrl.u32 %v464, 7
    %v466 = vsub.s32 0, %v465
    %v467 = vrot.slane %v463, %v466
    %v469 = vsel %vm109, %v467, 0
    %v472 = vsel %vm113, %v70, 0
    %474 = vmatprep.subr.bf16.mxu0 0
    %475 = vmatpush1.bf16.msra.mxu0 %v472
    %476 = vmatprep.subr.bf16.mxu0 0
    %477 = vmatpush1.bf16.msra.mxu0 0
    %478 = vmatprep.subr.bf16.mxu0 0
    %479 = vmatpush1.bf16.msra.mxu0 0
    %480 = vmatprep.subr.bf16.mxu0 0
    %481 = vmatpush1.bf16.msra.mxu0 0
    %482 = vmatprep.subr.bf16.mxu0 0
    %483 = vmatpush1.bf16.msra.mxu0 0
    %484 = vmatprep.subr.bf16.mxu0 0
    %485 = vmatpush1.bf16.msra.mxu0 0
    %486 = vmatprep.subr.bf16.mxu0 0
    %487 = vmatpush1.bf16.msra.mxu0 0
    %488 = vmatprep.subr.bf16.mxu0 0
    %489 = vmatpush1.bf16.msra.mxu0 0
    %490 = vmatprep.subr.bf16.mxu0 0
    %491 = vmatpush1.bf16.msra.mxu0 0
    %492 = vmatprep.subr.bf16.mxu0 0
    %493 = vmatpush1.bf16.msra.mxu0 0
    %494 = vmatprep.subr.bf16.mxu0 0
    %495 = vmatpush1.bf16.msra.mxu0 0
    %496 = vmatprep.subr.bf16.mxu0 0
    %497 = vmatpush1.bf16.msra.mxu0 0
    %498 = vmatprep.subr.bf16.mxu0 0
    %499 = vmatpush1.bf16.msra.mxu0 0
    %500 = vmatprep.subr.bf16.mxu0 0
    %501 = vmatpush1.bf16.msra.mxu0 0
    %502 = vmatprep.subr.bf16.mxu0 0
    %503 = vmatpush1.bf16.msra.mxu0 0
    %504 = vmatprep.subr.bf16.mxu0 0
    %505 = vmatpush1.bf16.msra.mxu0 0
    %506 = vmatprep.mubr.bf16.mxu0 0
    %507 = vmatmul.mubr.bf16.gmra.mrb[0].mxu0 %v469
    %v508 = vpop.f32.mrb[0].mxu0
    %v509 = vadd.f32 0.0, %v508
    %v510 = vpop.f32.mrb[0].mxu0
    %v511 = vpop.f32.mrb[0].mxu0
    %v512 = vpop.f32.mrb[0].mxu0
    %513 = vdwg.mxu0
    %vm514 = vcmp.lt.s32.totalorder %v55, 8
    %v515 = vsel %vm514, %v55, 8
    %v516 = vcvt.s32.f32 %v515
    %v517 = vmax.f32 %v516, 1.0
    %v518 = vrcp.pop %v517
    %520 = vset.pattern.permute.xlu0 0
    %521 = vperm.xlu0 %520, %v518
    %v522 = vpop.permute.xlu0 %521
    %v523 = vrot.slane %v522, 1
    %v524 = vrot.slane %v522, 2
    %v525 = vrot.slane %v522, 3
    %v526 = vrot.slane %v522, 4
    %v527 = vrot.slane %v522, 5
    %v528 = vrot.slane %v522, 6
    %v529 = vrot.slane %v522, 7
    %v538 = vmul.f32 %v152, %v522
    %v539 = vmul.f32 %v203, %v523
    %v540 = vmul.f32 %v254, %v524
    %v541 = vmul.f32 %v305, %v525
    %v542 = vmul.f32 %v356, %v526
    %v543 = vmul.f32 %v407, %v527
    %v544 = vmul.f32 %v458, %v528
    %v545 = vmul.f32 %v509, %v529
    %v546 = vpack.c.bf16 %v538, %v538
    %v547 = vpack.c.bf16 %v539, %v539
    %v548 = vpack.c.bf16 %v540, %v540
    %v549 = vpack.c.bf16 %v541, %v541
    %v550 = vpack.c.bf16 %v542, %v542
    %v551 = vpack.c.bf16 %v543, %v543
    %v552 = vpack.c.bf16 %v544, %v544
    %v553 = vpack.c.bf16 %v545, %v545
    %v554 = vld [vmem:[%s2] sm:$0xf]
    %v555 = vld [vmem:[%s2 + $0x4] sm:$0xf]
    %v556 = vld [vmem:[%s2 + $0x8] sm:$0xf]
    %v557 = vld [vmem:[%s2 + $0xc] sm:$0xf]
    %v558 = vld [vmem:[%s3] sm:$0x1]
    %v560 = vlaneseq
    %v561 = vshrl.u32 %v560, 7
    %v562 = vsub.s32 0, %v561
    %v563 = vrot.slane %v558, %v562
    %v573 = vunpack.c.l.b16 %v546
    %v574 = vunpack.c.l.b16 %v547
    %v575 = vunpack.c.l.b16 %v548
    %v576 = vunpack.c.l.b16 %v549
    %v577 = vunpack.c.l.b16 %v550
    %v578 = vunpack.c.l.b16 %v551
    %v579 = vunpack.c.l.b16 %v552
    %v580 = vunpack.c.l.b16 %v553
    %v581 = vrot.slane %v574, 7
    %vm582 = vcmask 1041409
    %v583 = vsel %vm582, %v581, %v573
    %v584 = vrot.slane %v575, 6
    %vm585 = vcmask 1042434
    %v586 = vsel %vm585, %v584, %v583
    %v587 = vrot.slane %v576, 5
    %vm588 = vcmask 1043459
    %v589 = vsel %vm588, %v587, %v586
    %v590 = vrot.slane %v577, 4
    %vm591 = vcmask 1044484
    %v592 = vsel %vm591, %v590, %v589
    %v593 = vrot.slane %v578, 3
    %vm594 = vcmask 1045509
    %v595 = vsel %vm594, %v593, %v592
    %v596 = vrot.slane %v579, 2
    %vm597 = vcmask 1046534
    %v598 = vsel %vm597, %v596, %v595
    %v599 = vrot.slane %v580, 1
    %vm600 = vcmask 1047559
    %v601 = vsel %vm600, %v599, %v598
    %v602 = vpack.c.b16 %v601, %v601
    %v607 = vunpack.c.l.b16 %v554
    %v608 = vunpack.c.l.b16 %v555
    %v609 = vunpack.c.l.b16 %v556
    %v610 = vunpack.c.l.b16 %v557
    %v611 = vpack.c.b16 %v608, %v607
    %v612 = vpack.c.b16 %v610, %v609
    %vm615 = vcmask 261120
    %v617 = vsel %vm615, %v602, 0
    %619 = vmatprep.subr.bf16.mxu0 0
    %620 = vmatpush1.bf16.msra.mxu0 %v611
    %621 = vmatprep.subr.bf16.mxu0 0
    %622 = vmatpush1.bf16.msra.mxu0 %v612
    %623 = vmatprep.subr.bf16.mxu0 0
    %624 = vmatpush1.bf16.msra.mxu0 0
    %625 = vmatprep.subr.bf16.mxu0 0
    %626 = vmatpush1.bf16.msra.mxu0 0
    %627 = vmatprep.subr.bf16.mxu0 0
    %628 = vmatpush1.bf16.msra.mxu0 0
    %629 = vmatprep.subr.bf16.mxu0 0
    %630 = vmatpush1.bf16.msra.mxu0 0
    %631 = vmatprep.subr.bf16.mxu0 0
    %632 = vmatpush1.bf16.msra.mxu0 0
    %633 = vmatprep.subr.bf16.mxu0 0
    %634 = vmatpush1.bf16.msra.mxu0 0
    %635 = vmatprep.subr.bf16.mxu0 0
    %636 = vmatpush1.bf16.msra.mxu0 0
    %637 = vmatprep.subr.bf16.mxu0 0
    %638 = vmatpush1.bf16.msra.mxu0 0
    %639 = vmatprep.subr.bf16.mxu0 0
    %640 = vmatpush1.bf16.msra.mxu0 0
    %641 = vmatprep.subr.bf16.mxu0 0
    %642 = vmatpush1.bf16.msra.mxu0 0
    %643 = vmatprep.subr.bf16.mxu0 0
    %644 = vmatpush1.bf16.msra.mxu0 0
    %645 = vmatprep.subr.bf16.mxu0 0
    %646 = vmatpush1.bf16.msra.mxu0 0
    %647 = vmatprep.subr.bf16.mxu0 0
    %648 = vmatpush1.bf16.msra.mxu0 0
    %649 = vmatprep.subr.bf16.mxu0 0
    %650 = vmatpush1.bf16.msra.mxu0 0
    %651 = vmatprep.mubr.bf16.mxu0 0
    %652 = vmatmul.mubr.bf16.gmra.mrb[0].mxu0 %v617
    %v653 = vpop.f32.mrb[0].mxu0
    %v654 = vadd.f32 %v563, %v653
    %v655 = vpop.f32.mrb[0].mxu0
    %v656 = vpop.f32.mrb[0].mxu0
    %v657 = vpop.f32.mrb[0].mxu0
    %658 = vdwg.mxu0
    %v659 = vtanh.pop %v654
    %v660 = vpack.c.bf16 %v659, %v659
    %v661 = vld [vmem:[#allocation5] sm:$0xf]
    %v662 = vld [vmem:[#allocation5 + $0x4] sm:$0xf]
    %v663 = vld [vmem:[#allocation5 + $0x8] sm:$0xf]
    %v664 = vld [vmem:[#allocation5 + $0xc] sm:$0xf]
    %v665 = vld [vmem:[%s5] sm:$0x1]
    %v667 = vlaneseq
    %v668 = vshrl.u32 %v667, 7
    %v669 = vsub.s32 0, %v668
    %v670 = vrot.slane %v665, %v669
    %v676 = vunpack.c.l.b16 %v661
    %v677 = vunpack.c.l.b16 %v662
    %v678 = vunpack.c.l.b16 %v663
    %v679 = vunpack.c.l.b16 %v664
    %v680 = vpack.c.b16 %v677, %v676
    %v681 = vpack.c.b16 %v679, %v678
    %v685 = vsel %vm615, %v660, 0
    %687 = vmatprep.subr.bf16.mxu0 0
    %688 = vmatpush1.bf16.msra.mxu0 %v680
    %689 = vmatprep.subr.bf16.mxu0 0
    %690 = vmatpush1.bf16.msra.mxu0 %v681
    %691 = vmatprep.subr.bf16.mxu0 0
    %692 = vmatpush1.bf16.msra.mxu0 0
    %693 = vmatprep.subr.bf16.mxu0 0
    %694 = vmatpush1.bf16.msra.mxu0 0
    %695 = vmatprep.subr.bf16.mxu0 0
    %696 = vmatpush1.bf16.msra.mxu0 0
    %697 = vmatprep.subr.bf16.mxu0 0
    %698 = vmatpush1.bf16.msra.mxu0 0
    %699 = vmatprep.subr.bf16.mxu0 0
    %700 = vmatpush1.bf16.msra.mxu0 0
    %701 = vmatprep.subr.bf16.mxu0 0
    %702 = vmatpush1.bf16.msra.mxu0 0
    %703 = vmatprep.subr.bf16.mxu0 0
    %704 = vmatpush1.bf16.msra.mxu0 0
    %705 = vmatprep.subr.bf16.mxu0 0
    %706 = vmatpush1.bf16.msra.mxu0 0
    %707 = vmatprep.subr.bf16.mxu0 0
    %708 = vmatpush1.bf16.msra.mxu0 0
    %709 = vmatprep.subr.bf16.mxu0 0
    %710 = vmatpush1.bf16.msra.mxu0 0
    %711 = vmatprep.subr.bf16.mxu0 0
    %712 = vmatpush1.bf16.msra.mxu0 0
    %713 = vmatprep.subr.bf16.mxu0 0
    %714 = vmatpush1.bf16.msra.mxu0 0
    %715 = vmatprep.subr.bf16.mxu0 0
    %716 = vmatpush1.bf16.msra.mxu0 0
    %717 = vmatprep.subr.bf16.mxu0 0
    %718 = vmatpush1.bf16.msra.mxu0 0
    %719 = vmatprep.mubr.bf16.mxu0 0
    %720 = vmatmul.mubr.bf16.gmra.mrb[0].mxu0 %v685
    %v721 = vpop.f32.mrb[0].mxu0
    %v722 = vadd.f32 %v670, %v721
    %v723 = vpop.f32.mrb[0].mxu0
    %v724 = vpop.f32.mrb[0].mxu0
    %v725 = vpop.f32.mrb[0].mxu0
    %726 = vdwg.mxu0
    %727 = vst [vmem:[#allocation7] sm:$0xff] %v722
    // Predicated region
    $region34: #{tpu_custom_call.1} parent=1 // pred_check
      _
    $region35: #{tpu_custom_call.1} parent=1 // pred_check_branch
      %729 = sbr.rel (0) target = $region37
    $region36: #{tpu_custom_call.1} parent=1 // pred_region
      %s731 = ssub.s32 128, 128
      %732 = vsyncadd [#allocation4], %s731
      %s734 = sshll.u32 [#allocation7], 4
      %s735 = int_to_ptr.vmem [resolvable:$true] %s734
      %737 = dma.vmem_to_hbm [thread:$0]  %s735, 128, %s6, [#allocation4]
    $region37: #{tpu_custom_call.1} parent=1 // pred_fallthru
      _
    // Predicated region
    $region38: #{tpu_custom_call.1} parent=1 // pred_check
      _
    $region39: #{tpu_custom_call.1} parent=1 // pred_check_branch
      %739 = sbr.rel (0) target = $region41
    $region40: #{tpu_custom_call.1} parent=1 // pred_region
      %740 = dma.done [#allocation4], 128
    $region41: #{tpu_custom_call.1} parent=1 // pred_fallthru
      _
    %741 = vsyncpa [#allocation3], 1
    %742 = vsyncpa [#allocation6], 1
    %743 = vsyncpa [#allocation4], 1

</llo_original>
